<compile_context>
chip_gen: v5e
topology: v5e:2x2
jax: 0.10.0
libtpu: 0.0.40
codegen_flags: <defaults>
</compile_context>

<pallas_src>
import functools
import math

import jax
import jax.numpy as jnp
import numpy as np
from jax.experimental import pallas as pl
from jax.experimental.pallas import tpu as pltpu


# --------------------------------------------------------------------------
# Kernel: transposed (feature-on-sublane, batch-on-lane) layout
# --------------------------------------------------------------------------
def _hsic_gumbel_kernel(xT_ref, w1_ref, w2_ref, w3_ref, b_ref, u_ref, out_ref,
                        *, inv_temp, h1, h2, d, num_samples, approx_recip):
    """One batch tile.

    Shapes inside the kernel (TB = batch tile on the lane axis):
      xT_ref : (D,  TB)      w1_ref : (H1, D)    w2_ref : (H2, H1)
      w3_ref : (D,  H2)      b_ref  : (H1+H2+D, 1)   (merged column biases)
      u_ref  : (S, D, TB)    out_ref: (D,  TB)
    """
    xT = xT_ref[...]                                                   # (D, TB)

    # 3-layer MLP on the MXU, f32 accumulation; bias broadcast over lanes.
    h = jax.nn.sigmoid(
        jnp.dot(w1_ref[...], xT, preferred_element_type=jnp.float32)
        + b_ref[0:h1, :])                                              # (H1, TB)
    h = jax.nn.sigmoid(
        jnp.dot(w2_ref[...], h, preferred_element_type=jnp.float32)
        + b_ref[h1:h1 + h2, :])                                        # (H2, TB)
    logits = (jnp.dot(w3_ref[...], h, preferred_element_type=jnp.float32)
              + b_ref[h1 + h2:h1 + h2 + d, :])                         # (D, TB)

    # Gumbel-softmax over the feature axis (axis 0 = sublanes), running max
    # over samples as a pure VPU elementwise maximum (S is small -> unrolled).
    acc = None
    for s in range(num_samples):
        u = u_ref[s]                                                   # (D, TB)
        g = -jnp.log(-jnp.log(u + 1e-20) + 1e-20)
        z = (g + logits) * inv_temp
        z = z - jnp.max(z, axis=0, keepdims=True)      # stable softmax (XLU reduce)
        e = jnp.exp(z)
        denom = jnp.sum(e, axis=0, keepdims=True)      # (1, TB)
        sm = e * pl.reciprocal(denom, approx=approx_recip)
        acc = sm if acc is None else jnp.maximum(acc, sm)
    out_ref[...] = acc


# --------------------------------------------------------------------------
# Wrapper
# --------------------------------------------------------------------------
def _default_block_b(batch):
    """Lane-dense batch tile; prefer >=2 grid steps (v7x megacore)."""
    for t in (512, 256, 128):
        if batch % t == 0 and batch // t >= 2:
            return t
    return batch  # tiny batches: one full block (valid since block == array dim)


def hsic_gumbel_forward(x, params, uniform_sdb, temperature, *,
                        block_b=None, approx_recip=False):
    """Fused forward.

    Args:
      x           : (B, D) float32 inputs.
      params      : dict with PyTorch-layout weights w1 (H1,D), w2 (H2,H1),
                    w3 (D,H2); biases b1 (H1,), b2 (H2,), b3 (D,);
                    plus "sigmas" (D,) and "sigma_y" scalar.
      uniform_sdb : Uniform(0,1) noise ALREADY sample-major + transposed,
                    shape (S, D, B)  (equivalent to torch.rand(B, S, D)
                    re-laid-out; generate it in this layout upstream so no
                    extra HBM transpose pass is paid).
      temperature : Gumbel-softmax temperature (trace-time constant).

    Returns: (importance_weights (B, D), sigmas, sigma_y)
    """
    B, D = x.shape
    S = uniform_sdb.shape[0]
    assert uniform_sdb.shape == (S, D, B), "noise must be (num_samples, D, B)"

    w1, w2, w3 = params["w1"], params["w2"], params["w3"]
    H1, H2 = w1.shape[0], w2.shape[0]
    bcat = jnp.concatenate([params["b1"], params["b2"], params["b3"]])[:, None]
    HT = H1 + H2 + D

    tb = _default_block_b(B) if block_b is None else block_b
    assert B % tb == 0 and (tb % 128 == 0 or tb == B), \
        "batch tile must divide B and be lane-dense (multiple of 128) or full"

    xT = x.T  # (D, B); tiny, one-off layout plumbing in the wrapper

    # TODO(synk): temperature is baked in at trace time; pass it via SMEM if it
    # must vary at runtime without recompiles.
    kernel = functools.partial(
        _hsic_gumbel_kernel,
        inv_temp=float(1.0 / temperature), h1=H1, h2=H2, d=D,
        num_samples=S, approx_recip=approx_recip)

    iw_T = pl.pallas_call(
        kernel,
        out_shape=jax.ShapeDtypeStruct((D, B), jnp.float32),
        grid=(B // tb,),
        in_specs=[
            pl.BlockSpec((D, tb), lambda i: (0, i)),        # x^T (batch-tiled, lanes)
            pl.BlockSpec((H1, D), lambda i: (0, 0)),        # w1 (resident)
            pl.BlockSpec((H2, H1), lambda i: (0, 0)),       # w2 (resident)
            pl.BlockSpec((D, H2), lambda i: (0, 0)),        # w3 (resident)
            pl.BlockSpec((HT, 1), lambda i: (0, 0)),        # merged biases (resident)
            pl.BlockSpec((S, D, tb), lambda i: (0, 0, i)),  # noise, sample-major
        ],
        out_specs=pl.BlockSpec((D, tb), lambda i: (0, i)),
        compiler_params=pltpu.CompilerParams(
            dimension_semantics=("parallel",)),
    )(xT, w1, w2, w3, bcat, uniform_sdb)

    # Present the module's (B, D) importance weights; the transpose is tiny
    # (B*D*4 bytes) compared to the (S, D, B) noise stream.
    return iw_T.T, params["sigmas"], params["sigma_y"]


# --------------------------------------------------------------------------
# Parameter init + plain-JAX reference
# --------------------------------------------------------------------------
def init_params(key, input_dim, layers):
    """PyTorch nn.Linear-style init: U(-1/sqrt(fan_in), 1/sqrt(fan_in)).
    Weights stored PyTorch-native as (out_features, in_features)."""
    dims = [input_dim] + list(layers) + [input_dim]
    params = {}
    keys = jax.random.split(key, 2 * (len(dims) - 1))
    for li in range(len(dims) - 1):
        fan_in, fan_out = dims[li], dims[li + 1]
        k = 1.0 / math.sqrt(fan_in)
        params[f"w{li + 1}"] = jax.random.uniform(
            keys[2 * li], (fan_out, fan_in), minval=-k, maxval=k,
            dtype=jnp.float32)
        params[f"b{li + 1}"] = jax.random.uniform(
            keys[2 * li + 1], (fan_out,), minval=-k, maxval=k,
            dtype=jnp.float32)
    params["sigmas"] = jnp.ones((input_dim,), dtype=jnp.float32)
    params["sigma_y"] = jnp.array(1.0, dtype=jnp.float32)
    return params


def reference_forward(x, params, uniform_bsd, temperature):
    """Plain-JAX reference of the module's forward (PyTorch semantics)."""
    h = jax.nn.sigmoid(x @ params["w1"].T + params["b1"])
    h = jax.nn.sigmoid(h @ params["w2"].T + params["b2"])
    logits = h @ params["w3"].T + params["b3"]
    g = -jnp.log(-jnp.log(uniform_bsd + 1e-20) + 1e-20)
    noisy = (g + logits[:, None, :]) * (1.0 / temperature)
    samples = jax.nn.softmax(noisy, axis=-1)
    return jnp.max(samples, axis=1)


# --------------------------------------------------------------------------
if __name__ == "__main__":
    input_dim = 16            # D
    hidden_layers = [32, 32]  # H1, H2
    batch = 256               # -> default tile 128 lanes, grid (2,), "parallel"
    num_samples = 5
    temperature = 0.1

    root = jax.random.PRNGKey(0)
    k_param, k_x, k_u = jax.random.split(root, 3)

    params = init_params(k_param, input_dim, hidden_layers)
    x = jax.random.normal(k_x, (batch, input_dim), dtype=jnp.float32)

    # Noise generated directly in the kernel-friendly sample-major (S, D, B)
    # layout; the reference view (B, S, D) is recovered only for verification.
    uniform_sdb = jax.random.uniform(
        k_u, (num_samples, input_dim, batch), dtype=jnp.float32)

    iw, sigmas, sigma_y = hsic_gumbel_forward(
        x, params, uniform_sdb, temperature)
    jax.block_until_ready(iw)

    uniform_bsd = jnp.transpose(uniform_sdb, (2, 0, 1))
    ref = reference_forward(x, params, uniform_bsd, temperature)
    np.testing.assert_allclose(np.asarray(iw), np.asarray(ref),
                               rtol=2e-4, atol=2e-5)
    assert iw.shape == (batch, input_dim)
    assert sigmas.shape == (input_dim,)
    assert sigma_y.shape == ()

    print("KERNEL_OK")
</pallas_src>

<mosaic_0001>
module attributes {stable_mosaic.version = 11 : i64} {
  func.func @_hsic_gumbel_kernel(%arg0: i32, %arg1: memref<16x128xf32, #tpu.memory_space<vmem>>, %arg2: memref<32x16xf32, #tpu.memory_space<vmem>>, %arg3: memref<32x32xf32, #tpu.memory_space<vmem>>, %arg4: memref<16x32xf32, #tpu.memory_space<vmem>>, %arg5: memref<80x1xf32, #tpu.memory_space<vmem>>, %arg6: memref<5x16x128xf32, #tpu.memory_space<vmem>>, %arg7: memref<16x128xf32, #tpu.memory_space<vmem>>) attributes {dimension_semantics = [#tpu.dimension_semantics<parallel>], iteration_bounds = array<i64: 2>, scalar_prefetch = 0 : i64, scratch_operands = 0 : i64, tpu.core_type = #tpu.core_type<tc>, window_params = [{transform_indices = @transform_0, window_bounds = array<i64: 16, 128>}, {pipeline_mode = #tpu.pipeline_mode<synchronous>, transform_indices = @transform_1, window_bounds = array<i64: 32, 16>}, {pipeline_mode = #tpu.pipeline_mode<synchronous>, transform_indices = @transform_2, window_bounds = array<i64: 32, 32>}, {pipeline_mode = #tpu.pipeline_mode<synchronous>, transform_indices = @transform_3, window_bounds = array<i64: 16, 32>}, {pipeline_mode = #tpu.pipeline_mode<synchronous>, transform_indices = @transform_4, window_bounds = array<i64: 80, 1>}, {transform_indices = @transform_5, window_bounds = array<i64: 5, 16, 128>}, {transform_indices = @transform_6, window_bounds = array<i64: 16, 128>}]} {
    %c0 = arith.constant 0 : index
    %c0_0 = arith.constant 0 : index
    %0 = vector.load %arg1[%c0, %c0_0] : memref<16x128xf32, #tpu.memory_space<vmem>>, vector<16x128xf32>
    %c0_1 = arith.constant 0 : index
    %c0_2 = arith.constant 0 : index
    %1 = vector.load %arg2[%c0_1, %c0_2] : memref<32x16xf32, #tpu.memory_space<vmem>>, vector<32x16xf32>
    %cst = arith.constant dense<0.000000e+00> : vector<32x128xf32>
    %2 = tpu.matmul %1, %0, %cst {dimension_numbers = #tpu.dot_dimension_numbers<[1], [0], [0], [1], [0, 0, 1, 1], [], []>} : vector<32x16xf32>, vector<16x128xf32>, vector<32x128xf32> -> vector<32x128xf32>
    %c0_3 = arith.constant 0 : index
    %c0_4 = arith.constant 0 : index
    %3 = vector.load %arg5[%c0_3, %c0_4] : memref<80x1xf32, #tpu.memory_space<vmem>>, vector<32x1xf32>
    %4 = vector.broadcast %3 : vector<32x1xf32> to vector<32x128xf32>
    %5 = arith.addf %2, %4 : vector<32x128xf32>
    %6 = arith.negf %5 : vector<32x128xf32>
    %7 = math.exp %6 : vector<32x128xf32>
    %cst_5 = arith.constant 1.000000e+00 : f32
    %8 = vector.broadcast %cst_5 : f32 to vector<32x128xf32>
    %9 = arith.addf %8, %7 : vector<32x128xf32>
    %10 = arith.divf %8, %9 : vector<32x128xf32>
    %c0_6 = arith.constant 0 : index
    %c0_7 = arith.constant 0 : index
    %11 = vector.load %arg3[%c0_6, %c0_7] : memref<32x32xf32, #tpu.memory_space<vmem>>, vector<32x32xf32>
    %cst_8 = arith.constant dense<0.000000e+00> : vector<32x128xf32>
    %12 = tpu.matmul %11, %10, %cst_8 {dimension_numbers = #tpu.dot_dimension_numbers<[1], [0], [0], [1], [0, 0, 1, 1], [], []>} : vector<32x32xf32>, vector<32x128xf32>, vector<32x128xf32> -> vector<32x128xf32>
    %c32 = arith.constant 32 : index
    %c0_9 = arith.constant 0 : index
    %13 = vector.load %arg5[%c32, %c0_9] : memref<80x1xf32, #tpu.memory_space<vmem>>, vector<32x1xf32>
    %14 = vector.broadcast %13 : vector<32x1xf32> to vector<32x128xf32>
    %15 = arith.addf %12, %14 : vector<32x128xf32>
    %16 = arith.negf %15 : vector<32x128xf32>
    %17 = math.exp %16 : vector<32x128xf32>
    %cst_10 = arith.constant 1.000000e+00 : f32
    %18 = vector.broadcast %cst_10 : f32 to vector<32x128xf32>
    %19 = arith.addf %18, %17 : vector<32x128xf32>
    %20 = arith.divf %18, %19 : vector<32x128xf32>
    %c0_11 = arith.constant 0 : index
    %c0_12 = arith.constant 0 : index
    %21 = vector.load %arg4[%c0_11, %c0_12] : memref<16x32xf32, #tpu.memory_space<vmem>>, vector<16x32xf32>
    %cst_13 = arith.constant dense<0.000000e+00> : vector<16x128xf32>
    %22 = tpu.matmul %21, %20, %cst_13 {dimension_numbers = #tpu.dot_dimension_numbers<[1], [0], [0], [1], [0, 0, 1, 1], [], []>} : vector<16x32xf32>, vector<32x128xf32>, vector<16x128xf32> -> vector<16x128xf32>
    %c64 = arith.constant 64 : index
    %c0_14 = arith.constant 0 : index
    %23 = vector.load %arg5[%c64, %c0_14] : memref<80x1xf32, #tpu.memory_space<vmem>>, vector<16x1xf32>
    %24 = vector.broadcast %23 : vector<16x1xf32> to vector<16x128xf32>
    %25 = arith.addf %22, %24 : vector<16x128xf32>
    %c0_15 = arith.constant 0 : index
    %c0_16 = arith.constant 0 : index
    %c0_17 = arith.constant 0 : index
    %26 = vector.load %arg6[%c0_15, %c0_16, %c0_17] : memref<5x16x128xf32, #tpu.memory_space<vmem>>, vector<1x16x128xf32>
    %27 = vector.shape_cast %26 : vector<1x16x128xf32> to vector<16x128xf32>
    %cst_18 = arith.constant 9.99999968E-21 : f32
    %28 = vector.broadcast %cst_18 : f32 to vector<16x128xf32>
    %29 = arith.addf %27, %28 : vector<16x128xf32>
    %30 = math.log %29 : vector<16x128xf32>
    %cst_19 = arith.constant 0.000000e+00 : f32
    %31 = vector.broadcast %cst_19 : f32 to vector<16x128xf32>
    %32 = arith.subf %31, %30 : vector<16x128xf32>
    %cst_20 = arith.constant 9.99999968E-21 : f32
    %33 = vector.broadcast %cst_20 : f32 to vector<16x128xf32>
    %34 = arith.addf %32, %33 : vector<16x128xf32>
    %35 = math.log %34 : vector<16x128xf32>
    %cst_21 = arith.constant 0.000000e+00 : f32
    %36 = vector.broadcast %cst_21 : f32 to vector<16x128xf32>
    %37 = arith.subf %36, %35 : vector<16x128xf32>
    %38 = arith.addf %37, %25 : vector<16x128xf32>
    %cst_22 = arith.constant 1.000000e+01 : f32
    %39 = vector.broadcast %cst_22 : f32 to vector<16x128xf32>
    %40 = arith.mulf %38, %39 : vector<16x128xf32>
    %cst_23 = arith.constant dense<0xFF800000> : vector<128xf32>
    %41 = vector.multi_reduction <maximumf>, %40, %cst_23 [0] : vector<16x128xf32> to vector<128xf32>
    %42 = vector.shape_cast %41 : vector<128xf32> to vector<1x128xf32>
    %43 = vector.broadcast %42 : vector<1x128xf32> to vector<16x128xf32>
    %44 = arith.subf %40, %43 : vector<16x128xf32>
    %45 = math.exp %44 : vector<16x128xf32>
    %cst_24 = arith.constant dense<0.000000e+00> : vector<128xf32>
    %46 = vector.multi_reduction <add>, %45, %cst_24 [0] : vector<16x128xf32> to vector<128xf32>
    %47 = vector.shape_cast %46 : vector<128xf32> to vector<1x128xf32>
    %48 = tpu.reciprocal %47 : vector<1x128xf32> -> vector<1x128xf32>
    %49 = vector.broadcast %48 : vector<1x128xf32> to vector<16x128xf32>
    %50 = arith.mulf %45, %49 : vector<16x128xf32>
    %c1 = arith.constant 1 : index
    %c0_25 = arith.constant 0 : index
    %c0_26 = arith.constant 0 : index
    %51 = vector.load %arg6[%c1, %c0_25, %c0_26] : memref<5x16x128xf32, #tpu.memory_space<vmem>>, vector<1x16x128xf32>
    %52 = vector.shape_cast %51 : vector<1x16x128xf32> to vector<16x128xf32>
    %cst_27 = arith.constant 9.99999968E-21 : f32
    %53 = vector.broadcast %cst_27 : f32 to vector<16x128xf32>
    %54 = arith.addf %52, %53 : vector<16x128xf32>
    %55 = math.log %54 : vector<16x128xf32>
    %cst_28 = arith.constant 0.000000e+00 : f32
    %56 = vector.broadcast %cst_28 : f32 to vector<16x128xf32>
    %57 = arith.subf %56, %55 : vector<16x128xf32>
    %cst_29 = arith.constant 9.99999968E-21 : f32
    %58 = vector.broadcast %cst_29 : f32 to vector<16x128xf32>
    %59 = arith.addf %57, %58 : vector<16x128xf32>
    %60 = math.log %59 : vector<16x128xf32>
    %cst_30 = arith.constant 0.000000e+00 : f32
    %61 = vector.broadcast %cst_30 : f32 to vector<16x128xf32>
    %62 = arith.subf %61, %60 : vector<16x128xf32>
    %63 = arith.addf %62, %25 : vector<16x128xf32>
    %cst_31 = arith.constant 1.000000e+01 : f32
    %64 = vector.broadcast %cst_31 : f32 to vector<16x128xf32>
    %65 = arith.mulf %63, %64 : vector<16x128xf32>
    %cst_32 = arith.constant dense<0xFF800000> : vector<128xf32>
    %66 = vector.multi_reduction <maximumf>, %65, %cst_32 [0] : vector<16x128xf32> to vector<128xf32>
    %67 = vector.shape_cast %66 : vector<128xf32> to vector<1x128xf32>
    %68 = vector.broadcast %67 : vector<1x128xf32> to vector<16x128xf32>
    %69 = arith.subf %65, %68 : vector<16x128xf32>
    %70 = math.exp %69 : vector<16x128xf32>
    %cst_33 = arith.constant dense<0.000000e+00> : vector<128xf32>
    %71 = vector.multi_reduction <add>, %70, %cst_33 [0] : vector<16x128xf32> to vector<128xf32>
    %72 = vector.shape_cast %71 : vector<128xf32> to vector<1x128xf32>
    %73 = tpu.reciprocal %72 : vector<1x128xf32> -> vector<1x128xf32>
    %74 = vector.broadcast %73 : vector<1x128xf32> to vector<16x128xf32>
    %75 = arith.mulf %70, %74 : vector<16x128xf32>
    %76 = arith.maximumf %50, %75 : vector<16x128xf32>
    %c2 = arith.constant 2 : index
    %c0_34 = arith.constant 0 : index
    %c0_35 = arith.constant 0 : index
    %77 = vector.load %arg6[%c2, %c0_34, %c0_35] : memref<5x16x128xf32, #tpu.memory_space<vmem>>, vector<1x16x128xf32>
    %78 = vector.shape_cast %77 : vector<1x16x128xf32> to vector<16x128xf32>
    %cst_36 = arith.constant 9.99999968E-21 : f32
    %79 = vector.broadcast %cst_36 : f32 to vector<16x128xf32>
    %80 = arith.addf %78, %79 : vector<16x128xf32>
    %81 = math.log %80 : vector<16x128xf32>
    %cst_37 = arith.constant 0.000000e+00 : f32
    %82 = vector.broadcast %cst_37 : f32 to vector<16x128xf32>
    %83 = arith.subf %82, %81 : vector<16x128xf32>
    %cst_38 = arith.constant 9.99999968E-21 : f32
    %84 = vector.broadcast %cst_38 : f32 to vector<16x128xf32>
    %85 = arith.addf %83, %84 : vector<16x128xf32>
    %86 = math.log %85 : vector<16x128xf32>
    %cst_39 = arith.constant 0.000000e+00 : f32
    %87 = vector.broadcast %cst_39 : f32 to vector<16x128xf32>
    %88 = arith.subf %87, %86 : vector<16x128xf32>
    %89 = arith.addf %88, %25 : vector<16x128xf32>
    %cst_40 = arith.constant 1.000000e+01 : f32
    %90 = vector.broadcast %cst_40 : f32 to vector<16x128xf32>
    %91 = arith.mulf %89, %90 : vector<16x128xf32>
    %cst_41 = arith.constant dense<0xFF800000> : vector<128xf32>
    %92 = vector.multi_reduction <maximumf>, %91, %cst_41 [0] : vector<16x128xf32> to vector<128xf32>
    %93 = vector.shape_cast %92 : vector<128xf32> to vector<1x128xf32>
    %94 = vector.broadcast %93 : vector<1x128xf32> to vector<16x128xf32>
    %95 = arith.subf %91, %94 : vector<16x128xf32>
    %96 = math.exp %95 : vector<16x128xf32>
    %cst_42 = arith.constant dense<0.000000e+00> : vector<128xf32>
    %97 = vector.multi_reduction <add>, %96, %cst_42 [0] : vector<16x128xf32> to vector<128xf32>
    %98 = vector.shape_cast %97 : vector<128xf32> to vector<1x128xf32>
    %99 = tpu.reciprocal %98 : vector<1x128xf32> -> vector<1x128xf32>
    %100 = vector.broadcast %99 : vector<1x128xf32> to vector<16x128xf32>
    %101 = arith.mulf %96, %100 : vector<16x128xf32>
    %102 = arith.maximumf %76, %101 : vector<16x128xf32>
    %c3 = arith.constant 3 : index
    %c0_43 = arith.constant 0 : index
    %c0_44 = arith.constant 0 : index
    %103 = vector.load %arg6[%c3, %c0_43, %c0_44] : memref<5x16x128xf32, #tpu.memory_space<vmem>>, vector<1x16x128xf32>
    %104 = vector.shape_cast %103 : vector<1x16x128xf32> to vector<16x128xf32>
    %cst_45 = arith.constant 9.99999968E-21 : f32
    %105 = vector.broadcast %cst_45 : f32 to vector<16x128xf32>
    %106 = arith.addf %104, %105 : vector<16x128xf32>
    %107 = math.log %106 : vector<16x128xf32>
    %cst_46 = arith.constant 0.000000e+00 : f32
    %108 = vector.broadcast %cst_46 : f32 to vector<16x128xf32>
    %109 = arith.subf %108, %107 : vector<16x128xf32>
    %cst_47 = arith.constant 9.99999968E-21 : f32
    %110 = vector.broadcast %cst_47 : f32 to vector<16x128xf32>
    %111 = arith.addf %109, %110 : vector<16x128xf32>
    %112 = math.log %111 : vector<16x128xf32>
    %cst_48 = arith.constant 0.000000e+00 : f32
    %113 = vector.broadcast %cst_48 : f32 to vector<16x128xf32>
    %114 = arith.subf %113, %112 : vector<16x128xf32>
    %115 = arith.addf %114, %25 : vector<16x128xf32>
    %cst_49 = arith.constant 1.000000e+01 : f32
    %116 = vector.broadcast %cst_49 : f32 to vector<16x128xf32>
    %117 = arith.mulf %115, %116 : vector<16x128xf32>
    %cst_50 = arith.constant dense<0xFF800000> : vector<128xf32>
    %118 = vector.multi_reduction <maximumf>, %117, %cst_50 [0] : vector<16x128xf32> to vector<128xf32>
    %119 = vector.shape_cast %118 : vector<128xf32> to vector<1x128xf32>
    %120 = vector.broadcast %119 : vector<1x128xf32> to vector<16x128xf32>
    %121 = arith.subf %117, %120 : vector<16x128xf32>
    %122 = math.exp %121 : vector<16x128xf32>
    %cst_51 = arith.constant dense<0.000000e+00> : vector<128xf32>
    %123 = vector.multi_reduction <add>, %122, %cst_51 [0] : vector<16x128xf32> to vector<128xf32>
    %124 = vector.shape_cast %123 : vector<128xf32> to vector<1x128xf32>
    %125 = tpu.reciprocal %124 : vector<1x128xf32> -> vector<1x128xf32>
    %126 = vector.broadcast %125 : vector<1x128xf32> to vector<16x128xf32>
    %127 = arith.mulf %122, %126 : vector<16x128xf32>
    %128 = arith.maximumf %102, %127 : vector<16x128xf32>
    %c4 = arith.constant 4 : index
    %c0_52 = arith.constant 0 : index
    %c0_53 = arith.constant 0 : index
    %129 = vector.load %arg6[%c4, %c0_52, %c0_53] : memref<5x16x128xf32, #tpu.memory_space<vmem>>, vector<1x16x128xf32>
    %130 = vector.shape_cast %129 : vector<1x16x128xf32> to vector<16x128xf32>
    %cst_54 = arith.constant 9.99999968E-21 : f32
    %131 = vector.broadcast %cst_54 : f32 to vector<16x128xf32>
    %132 = arith.addf %130, %131 : vector<16x128xf32>
    %133 = math.log %132 : vector<16x128xf32>
    %cst_55 = arith.constant 0.000000e+00 : f32
    %134 = vector.broadcast %cst_55 : f32 to vector<16x128xf32>
    %135 = arith.subf %134, %133 : vector<16x128xf32>
    %cst_56 = arith.constant 9.99999968E-21 : f32
    %136 = vector.broadcast %cst_56 : f32 to vector<16x128xf32>
    %137 = arith.addf %135, %136 : vector<16x128xf32>
    %138 = math.log %137 : vector<16x128xf32>
    %cst_57 = arith.constant 0.000000e+00 : f32
    %139 = vector.broadcast %cst_57 : f32 to vector<16x128xf32>
    %140 = arith.subf %139, %138 : vector<16x128xf32>
    %141 = arith.addf %140, %25 : vector<16x128xf32>
    %cst_58 = arith.constant 1.000000e+01 : f32
    %142 = vector.broadcast %cst_58 : f32 to vector<16x128xf32>
    %143 = arith.mulf %141, %142 : vector<16x128xf32>
    %cst_59 = arith.constant dense<0xFF800000> : vector<128xf32>
    %144 = vector.multi_reduction <maximumf>, %143, %cst_59 [0] : vector<16x128xf32> to vector<128xf32>
    %145 = vector.shape_cast %144 : vector<128xf32> to vector<1x128xf32>
    %146 = vector.broadcast %145 : vector<1x128xf32> to vector<16x128xf32>
    %147 = arith.subf %143, %146 : vector<16x128xf32>
    %148 = math.exp %147 : vector<16x128xf32>
    %cst_60 = arith.constant dense<0.000000e+00> : vector<128xf32>
    %149 = vector.multi_reduction <add>, %148, %cst_60 [0] : vector<16x128xf32> to vector<128xf32>
    %150 = vector.shape_cast %149 : vector<128xf32> to vector<1x128xf32>
    %151 = tpu.reciprocal %150 : vector<1x128xf32> -> vector<1x128xf32>
    %152 = vector.broadcast %151 : vector<1x128xf32> to vector<16x128xf32>
    %153 = arith.mulf %148, %152 : vector<16x128xf32>
    %154 = arith.maximumf %128, %153 : vector<16x128xf32>
    %c0_61 = arith.constant 0 : index
    %c0_62 = arith.constant 0 : index
    %155 = vector.load %arg7[%c0_61, %c0_62] : memref<16x128xf32, #tpu.memory_space<vmem>>, vector<16x128xf32>
    tpu.vector_store %arg7[%c0_61, %c0_62], %154 {strides = array<i32>} : memref<16x128xf32, #tpu.memory_space<vmem>>, vector<16x128xf32>,
    return
  }
  func.func @transform_0(%arg0: i32) -> (i32, i32) {
    %c0_i32 = arith.constant 0 : i32
    %c0_i32_0 = arith.constant 0 : i32
    return %c0_i32, %arg0 : i32, i32
  }
  func.func @transform_1(%arg0: i32) -> (i32, i32) {
    %c0_i32 = arith.constant 0 : i32
    %c0_i32_0 = arith.constant 0 : i32
    %c0_i32_1 = arith.constant 0 : i32
    return %c0_i32, %c0_i32_0 : i32, i32
  }
  func.func @transform_2(%arg0: i32) -> (i32, i32) {
    %c0_i32 = arith.constant 0 : i32
    %c0_i32_0 = arith.constant 0 : i32
    %c0_i32_1 = arith.constant 0 : i32
    return %c0_i32, %c0_i32_0 : i32, i32
  }
  func.func @transform_3(%arg0: i32) -> (i32, i32) {
    %c0_i32 = arith.constant 0 : i32
    %c0_i32_0 = arith.constant 0 : i32
    %c0_i32_1 = arith.constant 0 : i32
    return %c0_i32, %c0_i32_0 : i32, i32
  }
  func.func @transform_4(%arg0: i32) -> (i32, i32) {
    %c0_i32 = arith.constant 0 : i32
    %c0_i32_0 = arith.constant 0 : i32
    %c0_i32_1 = arith.constant 0 : i32
    return %c0_i32, %c0_i32_0 : i32, i32
  }
  func.func @transform_5(%arg0: i32) -> (i32, i32, i32) {
    %c0_i32 = arith.constant 0 : i32
    %c0_i32_0 = arith.constant 0 : i32
    %c0_i32_1 = arith.constant 0 : i32
    return %c0_i32, %c0_i32_0, %arg0 : i32, i32, i32
  }
  func.func @transform_6(%arg0: i32) -> (i32, i32) {
    %c0_i32 = arith.constant 0 : i32
    %c0_i32_0 = arith.constant 0 : i32
    return %c0_i32, %arg0 : i32, i32
  }
}

</mosaic_0001>

<llo_original>
// kernel: tpu_custom_call.1
$region0: #{tpu_custom_call.1}
  #allocation0 [shape = 'u32[]', space=smem, size = 0x4, offset = 0x4, fixed_abs, tag = 'smem constant byte address 0x4 - core index']
  #allocation1 [shape = 'u32[72,128]{1,0:T(1,128)}', space=vmem, size = 0x9000, scoped, tag = 'internal scratch']
  %s0 = inlined_call_operand.vmem [shape: f32[16,256], index: 0, kind: input, shape index: {}]
  %s1 = inlined_call_operand.vmem [shape: f32[32,16], index: 1, kind: input, shape index: {}]
  %s2 = inlined_call_operand.vmem [shape: f32[32,32], index: 2, kind: input, shape index: {}]
  %s3 = inlined_call_operand.vmem [shape: f32[16,32], index: 3, kind: input, shape index: {}]
  %s4 = inlined_call_operand.vmem [shape: f32[80,1], index: 4, kind: input, shape index: {}]
  %s5 = inlined_call_operand.hbm [shape: f32[5,16,256], index: 5, kind: input, shape index: {}]
  %s6 = inlined_call_operand.hbm [shape: f32[16,256], index: 6, kind: output, shape index: {}]
  %s7 = sld [smem:[#allocation0]]
  $region99: #{tpu_custom_call.1} parent=0
    _
  %s9 = ssub.s32 1, %s7
  %s10 = scalar_select 0, %s9, %s7
  $region1: #{tpu_custom_call.1} parent=0
    #allocation2 [shape = 'u8[16384]{0}', space=vmem, size = 0x4000, scoped, tag = 'input window, operand 0']
    #allocation3 [shape = 'u8[81920]{0}', space=vmem, size = 0x14000, scoped, tag = 'input window, operand 5']
    #allocation4 [shape = 's32[2]{0}', space=sflag, size = 0x8, scoped, tag = 'scoped memory for tpu_custom_call.1']
    #allocation5 [shape = 's32[2]{0}', space=sflag, size = 0x8, scoped, tag = 'scoped memory for tpu_custom_call.1']
    #allocation6 [shape = 'u8[16384]{0}', space=vmem, size = 0x4000, scoped, tag = 'output window, operand 0']
    %11 = vsyncpa [#allocation4], 0
    %s12 = scalar_lea.sflag [#allocation4], 1
    %13 = vsyncpa %s12, 0
    %14 = vsyncpa [#allocation5], 0
    %s15 = scalar_lea.sflag [#allocation5], 1
    %16 = vsyncpa %s15, 0
    loop: start=0, step=1, limit=4
    $region2: #{tpu_custom_call.1} parent=1 // loop_pre_header
      _
    $region3: #{tpu_custom_call.1} parent=1 // loop_header
      %s18 = sphi 0, %s22
      %p19 = scmp.ge.s32.totalorder %s18, 4
      %s28 = sphi 0, %s30
      %s31 = sphi 0, %s28
      %s32 = sphi 0, %s31
      %s48 = sphi 0, %s32
      %s52 = sphi 0, %s52
      %s54 = sphi 0, %s52
      %s55 = sphi 0, %s54
      %s69 = sphi 0, %s55
      %s73 = sphi 0, %s73
      %s75 = sphi 0, %s73
      %s76 = sphi 0, %s75
      %s90 = sphi 0, %s76
      %s94 = sphi 0, %s94
      %s96 = sphi 0, %s94
      %s97 = sphi 0, %s96
      %s111 = sphi 0, %s97
      %s115 = sphi 0, %s115
      %s117 = sphi 0, %s115
      %s118 = sphi 0, %s117
      %s132 = sphi 0, %s118
      %s138 = sphi 0, %s140
      %s141 = sphi 0, %s138
      %s142 = sphi 0, %s141
      %s158 = sphi 0, %s142
      %s164 = sphi 0, %s166
      %s167 = sphi 0, %s164
      %s168 = sphi 0, %s167
      %s184 = sphi 0, %s168
    $region4: #{tpu_custom_call.1} parent=1 // loop_header_branch
      %21 = sbr.rel (%p19) target = $region8
    $region5: #{tpu_custom_call.1} parent=1 // loop_body
      %s23 = ssub.s32 %s18, 1
      %s24 = ssub.s32 %s18, 2
      %s25 = sadd.s32 %s18, 1
      %s26 = ssub.s32 %s18, %s25
      %p27 = scmp.eq.s32.totalorder %s26, 0
      %s29 = sadd.s32 %s28, 1
      %s30 = scalar_select %p27, %s28, %s29
      %p33 = pneg %p27
      %p34 = scmp.eq.s32.totalorder %s18, 1
      %p35 = por %p33, %p34
      %p36 = scmp.ne.s32.totalorder %s28, %s31
      %p37 = scmp.eq.s32.totalorder %s18, 0
      %p38 = por %p36, %p37
      %p39 = scmp.ne.s32.totalorder %s28, %s31
      %p40 = scmp.eq.s32.totalorder %s23, 1
      %p41 = por %p39, %p40
      %p42 = scmp.ne.s32.totalorder %s31, %s32
      %p43 = scmp.eq.s32.totalorder %s23, 0
      %p44 = por %p42, %p43
      %p45 = scmp.ne.s32.totalorder %s31, %s32
      %p46 = scmp.eq.s32.totalorder %s24, 1
      %p47 = por %p45, %p46
      %p49 = scmp.ne.s32.totalorder %s32, %s48
      %p50 = scmp.eq.s32.totalorder %s24, 0
      %p51 = por %p49, %p50
      %s53 = sadd.s32 %s52, 1
      %p56 = scmp.eq.s32.totalorder %s18, 1
      %p57 = scmp.ne.s32.totalorder %s52, %s54
      %p58 = scmp.eq.s32.totalorder %s18, 0
      %p59 = por %p57, %p58
      %p60 = scmp.ne.s32.totalorder %s52, %s54
      %p61 = scmp.eq.s32.totalorder %s23, 1
      %p62 = por %p60, %p61
      %p63 = scmp.ne.s32.totalorder %s54, %s55
      %p64 = scmp.eq.s32.totalorder %s23, 0
      %p65 = por %p63, %p64
      %p66 = scmp.ne.s32.totalorder %s54, %s55
      %p67 = scmp.eq.s32.totalorder %s24, 1
      %p68 = por %p66, %p67
      %p70 = scmp.ne.s32.totalorder %s55, %s69
      %p71 = scmp.eq.s32.totalorder %s24, 0
      %p72 = por %p70, %p71
      %s74 = sadd.s32 %s73, 1
      %p77 = scmp.eq.s32.totalorder %s18, 1
      %p78 = scmp.ne.s32.totalorder %s73, %s75
      %p79 = scmp.eq.s32.totalorder %s18, 0
      %p80 = por %p78, %p79
      %p81 = scmp.ne.s32.totalorder %s73, %s75
      %p82 = scmp.eq.s32.totalorder %s23, 1
      %p83 = por %p81, %p82
      %p84 = scmp.ne.s32.totalorder %s75, %s76
      %p85 = scmp.eq.s32.totalorder %s23, 0
      %p86 = por %p84, %p85
      %p87 = scmp.ne.s32.totalorder %s75, %s76
      %p88 = scmp.eq.s32.totalorder %s24, 1
      %p89 = por %p87, %p88
      %p91 = scmp.ne.s32.totalorder %s76, %s90
      %p92 = scmp.eq.s32.totalorder %s24, 0
      %p93 = por %p91, %p92
      %s95 = sadd.s32 %s94, 1
      %p98 = scmp.eq.s32.totalorder %s18, 1
      %p99 = scmp.ne.s32.totalorder %s94, %s96
      %p100 = scmp.eq.s32.totalorder %s18, 0
      %p101 = por %p99, %p100
      %p102 = scmp.ne.s32.totalorder %s94, %s96
      %p103 = scmp.eq.s32.totalorder %s23, 1
      %p104 = por %p102, %p103
      %p105 = scmp.ne.s32.totalorder %s96, %s97
      %p106 = scmp.eq.s32.totalorder %s23, 0
      %p107 = por %p105, %p106
      %p108 = scmp.ne.s32.totalorder %s96, %s97
      %p109 = scmp.eq.s32.totalorder %s24, 1
      %p110 = por %p108, %p109
      %p112 = scmp.ne.s32.totalorder %s97, %s111
      %p113 = scmp.eq.s32.totalorder %s24, 0
      %p114 = por %p112, %p113
      %s116 = sadd.s32 %s115, 1
      %p119 = scmp.eq.s32.totalorder %s18, 1
      %p120 = scmp.ne.s32.totalorder %s115, %s117
      %p121 = scmp.eq.s32.totalorder %s18, 0
      %p122 = por %p120, %p121
      %p123 = scmp.ne.s32.totalorder %s115, %s117
      %p124 = scmp.eq.s32.totalorder %s23, 1
      %p125 = por %p123, %p124
      %p126 = scmp.ne.s32.totalorder %s117, %s118
      %p127 = scmp.eq.s32.totalorder %s23, 0
      %p128 = por %p126, %p127
      %p129 = scmp.ne.s32.totalorder %s117, %s118
      %p130 = scmp.eq.s32.totalorder %s24, 1
      %p131 = por %p129, %p130
      %p133 = scmp.ne.s32.totalorder %s118, %s132
      %p134 = scmp.eq.s32.totalorder %s24, 0
      %p135 = por %p133, %p134
      %s136 = ssub.s32 %s18, %s25
      %p137 = scmp.eq.s32.totalorder %s136, 0
      %s139 = sadd.s32 %s138, 1
      %s140 = scalar_select %p137, %s138, %s139
      %p143 = pneg %p137
      %p144 = scmp.eq.s32.totalorder %s18, 1
      %p145 = por %p143, %p144
      %p146 = scmp.ne.s32.totalorder %s138, %s141
      %p147 = scmp.eq.s32.totalorder %s18, 0
      %p148 = por %p146, %p147
      %p149 = scmp.ne.s32.totalorder %s138, %s141
      %p150 = scmp.eq.s32.totalorder %s23, 1
      %p151 = por %p149, %p150
      %p152 = scmp.ne.s32.totalorder %s141, %s142
      %p153 = scmp.eq.s32.totalorder %s23, 0
      %p154 = por %p152, %p153
      %p155 = scmp.ne.s32.totalorder %s141, %s142
      %p156 = scmp.eq.s32.totalorder %s24, 1
      %p157 = por %p155, %p156
      %p159 = scmp.ne.s32.totalorder %s142, %s158
      %p160 = scmp.eq.s32.totalorder %s24, 0
      %p161 = por %p159, %p160
      %s162 = ssub.s32 %s18, %s25
      %p163 = scmp.eq.s32.totalorder %s162, 0
      %s165 = sadd.s32 %s164, 1
      %s166 = scalar_select %p163, %s164, %s165
      %p169 = pneg %p163
      %p170 = scmp.eq.s32.totalorder %s18, 1
      %p171 = por %p169, %p170
      %p172 = scmp.ne.s32.totalorder %s164, %s167
      %p173 = scmp.eq.s32.totalorder %s18, 0
      %p174 = por %p172, %p173
      %p175 = scmp.ne.s32.totalorder %s164, %s167
      %p176 = scmp.eq.s32.totalorder %s23, 1
      %p177 = por %p175, %p176
      %p178 = scmp.ne.s32.totalorder %s167, %s168
      %p179 = scmp.eq.s32.totalorder %s23, 0
      %p180 = por %p178, %p179
      %p181 = scmp.ne.s32.totalorder %s167, %s168
      %p182 = scmp.eq.s32.totalorder %s24, 1
      %p183 = por %p181, %p182
      %p185 = scmp.ne.s32.totalorder %s168, %s184
      %p186 = scmp.eq.s32.totalorder %s24, 0
      %p187 = por %p185, %p186
      %p188 = scmp.le.s32.totalorder 1, %s18
      %p189 = scmp.lt.s32.totalorder %s18, 3
      %p190 = pnand %p188, %p189
      %p191 = pneg %p190
      // Predicated region
      $region9: #{tpu_custom_call.1} parent=5 // pred_check
        _
      $region10: #{tpu_custom_call.1} parent=5 // pred_check_branch
        %193 = sbr.rel (%p190) target = $region12
      $region11: #{tpu_custom_call.1} parent=5 // pred_region
        %s194 = ssub.s32 %s18, 1
        // Predicated region
        $region13: #{tpu_custom_call.1} parent=11 // pred_check
          %p195 = pneg %p65
        $region14: #{tpu_custom_call.1} parent=11 // pred_check_branch
          %197 = sbr.rel (%p195) target = $region16
        $region15: #{tpu_custom_call.1} parent=11 // pred_region
          _
        $region16: #{tpu_custom_call.1} parent=11 // pred_fallthru
          _
        // Predicated region
        $region17: #{tpu_custom_call.1} parent=11 // pred_check
          %p198 = pneg %p86
        $region18: #{tpu_custom_call.1} parent=11 // pred_check_branch
          %200 = sbr.rel (%p198) target = $region20
        $region19: #{tpu_custom_call.1} parent=11 // pred_region
          _
        $region20: #{tpu_custom_call.1} parent=11 // pred_fallthru
          _
        // Predicated region
        $region21: #{tpu_custom_call.1} parent=11 // pred_check
          %p201 = pneg %p107
        $region22: #{tpu_custom_call.1} parent=11 // pred_check_branch
          %203 = sbr.rel (%p201) target = $region24
        $region23: #{tpu_custom_call.1} parent=11 // pred_region
          _
        $region24: #{tpu_custom_call.1} parent=11 // pred_fallthru
          _
        // Predicated region
        $region25: #{tpu_custom_call.1} parent=11 // pred_check
          %p204 = pneg %p128
        $region26: #{tpu_custom_call.1} parent=11 // pred_check_branch
          %206 = sbr.rel (%p204) target = $region28
        $region27: #{tpu_custom_call.1} parent=11 // pred_region
          _
        $region28: #{tpu_custom_call.1} parent=11 // pred_fallthru
          _
      $region12: #{tpu_custom_call.1} parent=5 // pred_fallthru
        _
      %p207 = scmp.lt.s32.totalorder %s18, 2
      // Predicated region
      $region29: #{tpu_custom_call.1} parent=5 // pred_check
        %p208 = pneg %p207
      $region30: #{tpu_custom_call.1} parent=5 // pred_check_branch
        %210 = sbr.rel (%p208) target = $region32
      $region31: #{tpu_custom_call.1} parent=5 // pred_region
        // Predicated region
        $region33: #{tpu_custom_call.1} parent=31 // pred_check
          %p211 = pneg %p38
        $region34: #{tpu_custom_call.1} parent=31 // pred_check_branch
          %213 = sbr.rel (%p211) target = $region36
        $region35: #{tpu_custom_call.1} parent=31 // pred_region
          %s214 = sand.u32 %s28, 1
          %s215 = sand.u32 %s28, 1
          %s216 = smul.addr %s215, 16
          %s217 = scalar_lea.vmem [#allocation2], %s216
          %s218 = smul.addr %s18, 8
          %s219 = scalar_lea.vmem %s0, %s218
          // Predicated region
          $region37: #{tpu_custom_call.1} parent=35 // pred_check
            _
          $region38: #{tpu_custom_call.1} parent=35 // pred_check_branch
            %221 = sbr.rel (0) target = $region40
          $region39: #{tpu_custom_call.1} parent=35 // pred_region
            // Predicated region
            $region41: #{tpu_custom_call.1} parent=39 // pred_check
              _
            $region42: #{tpu_custom_call.1} parent=39 // pred_check_branch
              %223 = sbr.rel (0) target = $region44
            $region43: #{tpu_custom_call.1} parent=39 // pred_region
              // Predicated region
              $region56: #{tpu_custom_call.1} parent=43 // pred_check
                _
              $region57: #{tpu_custom_call.1} parent=43 // pred_check_branch
                %241 = sbr.rel (0) target = $region59
              $region58: #{tpu_custom_call.1} parent=43 // pred_region
                loop: start=0, step=1, limit=1
                $region60: #{tpu_custom_call.1} parent=58 // loop_pre_header
                  _
                $region61: #{tpu_custom_call.1} parent=58 // loop_header
                  %s243 = sphi 0, %s247
                  %p244 = scmp.ge.s32.totalorder %s243, 1
                  %s248 = sphi %s219, %s219
                  %s249 = sphi %s217, %s217
                $region62: #{tpu_custom_call.1} parent=58 // loop_header_branch
                  %246 = sbr.rel (%p244) target = $region66
                $region63: #{tpu_custom_call.1} parent=58 // loop_body
                  %v250 = vld [vmem:[%s248] sm:$0xff]
                  %251 = vst [vmem:[%s249] sm:$0xff] %v250
                  %v252 = vld [vmem:[%s248 + $0x10] sm:$0xff]
                  %253 = vst [vmem:[%s249 + $0x8] sm:$0xff] %v252
                $region64: #{tpu_custom_call.1} parent=58 // loop_footer
                  %s247 = sadd.s32 1, %s243
                $region65: #{tpu_custom_call.1} parent=58 // loop_footer_branch
                  %242 = sbr.rel target = $region61
                $region66: #{tpu_custom_call.1} parent=58 // loop_exit
                  _
              $region59: #{tpu_custom_call.1} parent=43 // pred_fallthru
                _
              // Predicated region
              $region67: #{tpu_custom_call.1} parent=43 // pred_check
                _
              $region68: #{tpu_custom_call.1} parent=43 // pred_check_branch
                %255 = sbr.rel target = $region70
              $region69: #{tpu_custom_call.1} parent=43 // pred_region
                _
              $region70: #{tpu_custom_call.1} parent=43 // pred_fallthru
                _
            $region44: #{tpu_custom_call.1} parent=39 // pred_fallthru
              _
            // Predicated region
            $region45: #{tpu_custom_call.1} parent=39 // pred_check
              _
            $region46: #{tpu_custom_call.1} parent=39 // pred_check_branch
              %225 = sbr.rel target = $region48
            $region47: #{tpu_custom_call.1} parent=39 // pred_region
              %s227 = ssub.s32 256, 1
              loop: start=0, step=1, limit=1
              $region49: #{tpu_custom_call.1} parent=47 // loop_pre_header
                _
              $region50: #{tpu_custom_call.1} parent=47 // loop_header
                %s229 = sphi 0, %s233
                %p230 = scmp.ge.s32.totalorder %s229, 1
                %s234 = sphi %s219, %s219
                %s235 = sphi %s217, %s217
              $region51: #{tpu_custom_call.1} parent=47 // loop_header_branch
                %232 = sbr.rel (%p230) target = $region55
              $region52: #{tpu_custom_call.1} parent=47 // loop_body
                %v236 = vld [vmem:[%s234] sm:%s227]
                %237 = vst [vmem:[%s235] sm:%s227] %v236
                %v238 = vld [vmem:[%s234 + $0x10] sm:%s227]
                %239 = vst [vmem:[%s235 + $0x8] sm:%s227] %v238
              $region53: #{tpu_custom_call.1} parent=47 // loop_footer
                %s233 = sadd.s32 1, %s229
              $region54: #{tpu_custom_call.1} parent=47 // loop_footer_branch
                %228 = sbr.rel target = $region50
              $region55: #{tpu_custom_call.1} parent=47 // loop_exit
                _
            $region48: #{tpu_custom_call.1} parent=39 // pred_fallthru
              _
          $region40: #{tpu_custom_call.1} parent=35 // pred_fallthru
            _
          %256 = vnop
        $region36: #{tpu_custom_call.1} parent=31 // pred_fallthru
          _
        // Predicated region
        $region71: #{tpu_custom_call.1} parent=31 // pred_check
          %p257 = pneg %p148
        $region72: #{tpu_custom_call.1} parent=31 // pred_check_branch
          %259 = sbr.rel (%p257) target = $region74
        $region73: #{tpu_custom_call.1} parent=31 // pred_region
          %s260 = sand.u32 %s138, 1
          %s261 = scalar_lea.sflag [#allocation4], %s260
          %s262 = sand.u32 %s138, 1
          %s263 = smul.addr %s262, 80
          %s264 = scalar_lea.vmem [#allocation3], %s263
          %266 = vsyncadd %s261, 0
          %s267 = smul.addr %s18, 8
          %s268 = scalar_lea.hbm %s5, %s267
          %s269 = sshll.u32 %s268, 4
          %s270 = int_to_ptr.hbm [resolvable:$true] %s269
          %s271 = sshll.u32 %s264, 4
          %s272 = int_to_ptr.vmem [resolvable:$true] %s271
          %277 = dma.hbm_to_vmem [thread:$0]  %s270, 1280, %s272, %s261, 256, 128, 8
        $region74: #{tpu_custom_call.1} parent=31 // pred_fallthru
          _
      $region32: #{tpu_custom_call.1} parent=5 // pred_fallthru
        _
      %p278 = scmp.le.s32.totalorder 1, %s18
      %p279 = scmp.lt.s32.totalorder %s18, 3
      %p280 = pnand %p278, %p279
      %p281 = pneg %p280
      // Predicated region
      $region75: #{tpu_custom_call.1} parent=5 // pred_check
        _
      $region76: #{tpu_custom_call.1} parent=5 // pred_check_branch
        %283 = sbr.rel (%p280) target = $region78
      $region77: #{tpu_custom_call.1} parent=5 // pred_region
        %s284 = ssub.s32 %s18, 1
        %s285 = sand.u32 %s31, 1
        %s286 = sand.u32 %s31, 1
        %s287 = smul.addr %s286, 16
        %s288 = scalar_lea.vmem [#allocation2], %s287
        // Predicated region
        $region79: #{tpu_custom_call.1} parent=77 // pred_check
          %p289 = pneg %p44
        $region80: #{tpu_custom_call.1} parent=77 // pred_check_branch
          %291 = sbr.rel (%p289) target = $region82
        $region81: #{tpu_custom_call.1} parent=77 // pred_region
          _
        $region82: #{tpu_custom_call.1} parent=77 // pred_fallthru
          _
        %s292 = sand.u32 %s141, 1
        %s293 = scalar_lea.sflag [#allocation4], %s292
        %s294 = sand.u32 %s141, 1
        %s295 = smul.addr %s294, 80
        %s296 = scalar_lea.vmem [#allocation3], %s295
        // Predicated region
        $region83: #{tpu_custom_call.1} parent=77 // pred_check
          %p297 = pneg %p154
        $region84: #{tpu_custom_call.1} parent=77 // pred_check_branch
          %299 = sbr.rel (%p297) target = $region86
        $region85: #{tpu_custom_call.1} parent=77 // pred_region
          %301 = dma.done %s293, 1280
        $region86: #{tpu_custom_call.1} parent=77 // pred_fallthru
          _
        %s302 = sand.u32 %s31, 1
        %s303 = sand.u32 %s31, 1
        %s304 = smul.addr %s303, 16
        %s305 = scalar_lea.vmem [#allocation2], %s304
        %p306 = pneg %p44
        %p307 = pneg %p41
        %p308 = pneg %p65
        %p309 = pneg %p62
        %p310 = pneg %p86
        %p311 = pneg %p83
        %p312 = pneg %p107
        %p313 = pneg %p104
        %p314 = pneg %p128
        %p315 = pneg %p125
        %s316 = sand.u32 %s141, 1
        %s317 = scalar_lea.sflag [#allocation4], %s316
        %s318 = sand.u32 %s141, 1
        %s319 = smul.addr %s318, 80
        %s320 = scalar_lea.vmem [#allocation3], %s319
        %p321 = pneg %p154
        %p322 = pneg %p151
        %p323 = pneg %p180
        %p324 = pneg %p177
        %s325 = sand.u32 %s167, 1
        %s326 = scalar_lea.sflag [#allocation5], %s325
        %s327 = sand.u32 %s167, 1
        %s328 = smul.addr %s327, 16
        %s329 = scalar_lea.vmem [#allocation6], %s328
        %v330 = vld [vmem:[%s288] sm:$0xff]
        %v331 = vld [vmem:[%s288 + $0x8] sm:$0xff]
        %v332 = vld [vmem:[%s1] sm:$0xff]
        %v333 = vld [vmem:[%s1 + $0x8] sm:$0xff]
        %v334 = vld [vmem:[%s1 + $0x10] sm:$0xff]
        %v335 = vld [vmem:[%s1 + $0x18] sm:$0xff]
        %v336 = vld [vmem:[%s4] sm:$0xff]
        %v337 = vld [vmem:[%s4 + $0x8] sm:$0xff]
        %v338 = vld [vmem:[%s4 + $0x10] sm:$0xff]
        %v339 = vld [vmem:[%s4 + $0x18] sm:$0xff]
        %341 = vset.pattern.permute.xlu0 0
        %342 = vperm.xlu0 %341, %v336
        %v343 = vpop.permute.xlu0 %342
        %346 = vset.pattern.permute.xlu0 0
        %347 = vperm.xlu0 %346, %v337
        %v348 = vpop.permute.xlu0 %347
        %351 = vset.pattern.permute.xlu0 0
        %352 = vperm.xlu0 %351, %v338
        %v353 = vpop.permute.xlu0 %352
        %356 = vset.pattern.permute.xlu0 0
        %357 = vperm.xlu0 %356, %v339
        %v358 = vpop.permute.xlu0 %357
        %vm360 = vcmask 130048
        %v362 = vsel %vm360, %v332, 0
        %v365 = vsel %vm360, %v333, 0
        %v368 = vsel %vm360, %v334, 0
        %v371 = vsel %vm360, %v335, 0
        %373 = vmatpush.msra.mxu0 0.0
        %374 = vmatpush.msra.mxu0 0.0
        %375 = vmatpush.msra.mxu0 0.0
        %376 = vmatpush.msra.mxu0 0.0
        %377 = vmatpush.msra.mxu0 0.0
        %378 = vmatpush.msra.mxu0 0.0
        %379 = vmatpush.msra.mxu0 0.0
        %380 = vmatpush.msra.mxu0 0.0
        %381 = vmatpush.msra.mxu0 0.0
        %382 = vmatpush.msra.mxu0 0.0
        %383 = vmatpush.msra.mxu0 0.0
        %384 = vmatpush.msra.mxu0 0.0
        %385 = vmatpush.msra.mxu0 0.0
        %386 = vmatpush.msra.mxu0 0.0
        %387 = vmatpush.msra.mxu0 %v331
        %388 = vmatpush.msra.mxu0 %v330
        %389 = vmatmul.f32.gmra.mxu0 %v362
        %v390 = vpop.f32.mrf.mxu0
        %v391 = vadd.f32 %v343, %v390
        %392 = vmatmul.f32.gmra.mxu0 %v365
        %v393 = vpop.f32.mrf.mxu0
        %v394 = vadd.f32 %v348, %v393
        %395 = vmatmul.f32.gmra.mxu0 %v368
        %v396 = vpop.f32.mrf.mxu0
        %v397 = vadd.f32 %v353, %v396
        %398 = vmatmul.f32.gmra.mxu0 %v371
        %v399 = vpop.f32.mrf.mxu0
        %v400 = vadd.f32 %v358, %v399
        %401 = vdwg.mxu0
        %v402 = vxor.u32 %v391, 2147483648
        %v403 = vxor.u32 %v394, 2147483648
        %v404 = vxor.u32 %v397, 2147483648
        %v405 = vxor.u32 %v400, 2147483648
        %v406 = vmul.f32 %v402, 1.442695
        %v407 = vpow.pop %v406
        %v408 = vmul.f32 %v403, 1.442695
        %v409 = vpow.pop %v408
        %v410 = vmul.f32 %v404, 1.442695
        %v411 = vpow.pop %v410
        %v412 = vmul.f32 %v405, 1.442695
        %v413 = vpow.pop %v412
        %v414 = vadd.f32 %v407, 1.0
        %v415 = vadd.f32 %v409, 1.0
        %v416 = vadd.f32 %v411, 1.0
        %v417 = vadd.f32 %v413, 1.0
        %v418 = vrcp.pop %v414
        %v419 = vmul.f32 %v414, %v418
        %v420 = vsub.f32 1.0, %v419
        %v421 = vmul.f32 %v418, %v420
        %v422 = vadd.f32 %v418, %v421
        %vm423 = vweird.f32 %v414
        %vm424 = vweird.f32 %v418
        %vm425 = vmor %vm423, %vm424
        %v426 = vsel %vm425, %v418, %v422
        %v427 = vand.u32 2147483647, %v414
        %vm428 = vcmp.eq.f32.partialorder %v427, 8.507059e+37
        %v429 = vand.u32 %v414, 2147483648
        %v430 = vor.u32 1.1754944e-38, %v429
        %v431 = vsel %vm428, %v430, %v426
        %v432 = vmul.f32 1.0, %v431
        %v433 = vrcp.pop %v415
        %v434 = vmul.f32 %v415, %v433
        %v435 = vsub.f32 1.0, %v434
        %v436 = vmul.f32 %v433, %v435
        %v437 = vadd.f32 %v433, %v436
        %vm438 = vweird.f32 %v415
        %vm439 = vweird.f32 %v433
        %vm440 = vmor %vm438, %vm439
        %v441 = vsel %vm440, %v433, %v437
        %v442 = vand.u32 2147483647, %v415
        %vm443 = vcmp.eq.f32.partialorder %v442, 8.507059e+37
        %v444 = vand.u32 %v415, 2147483648
        %v445 = vor.u32 1.1754944e-38, %v444
        %v446 = vsel %vm443, %v445, %v441
        %v447 = vmul.f32 1.0, %v446
        %v448 = vrcp.pop %v416
        %v449 = vmul.f32 %v416, %v448
        %v450 = vsub.f32 1.0, %v449
        %v451 = vmul.f32 %v448, %v450
        %v452 = vadd.f32 %v448, %v451
        %vm453 = vweird.f32 %v416
        %vm454 = vweird.f32 %v448
        %vm455 = vmor %vm453, %vm454
        %v456 = vsel %vm455, %v448, %v452
        %v457 = vand.u32 2147483647, %v416
        %vm458 = vcmp.eq.f32.partialorder %v457, 8.507059e+37
        %v459 = vand.u32 %v416, 2147483648
        %v460 = vor.u32 1.1754944e-38, %v459
        %v461 = vsel %vm458, %v460, %v456
        %v462 = vmul.f32 1.0, %v461
        %v463 = vrcp.pop %v417
        %v464 = vmul.f32 %v417, %v463
        %v465 = vsub.f32 1.0, %v464
        %v466 = vmul.f32 %v463, %v465
        %v467 = vadd.f32 %v463, %v466
        %vm468 = vweird.f32 %v417
        %vm469 = vweird.f32 %v463
        %vm470 = vmor %vm468, %vm469
        %v471 = vsel %vm470, %v463, %v467
        %v472 = vand.u32 2147483647, %v417
        %vm473 = vcmp.eq.f32.partialorder %v472, 8.507059e+37
        %v474 = vand.u32 %v417, 2147483648
        %v475 = vor.u32 1.1754944e-38, %v474
        %v476 = vsel %vm473, %v475, %v471
        %v477 = vmul.f32 1.0, %v476
        %v478 = vld [vmem:[%s2] sm:$0xff]
        %v479 = vld [vmem:[%s2 + $0x8] sm:$0xff]
        %v480 = vld [vmem:[%s2 + $0x10] sm:$0xff]
        %v481 = vld [vmem:[%s2 + $0x18] sm:$0xff]
        %v482 = vld [vmem:[%s4 + $0x20] sm:$0xff]
        %v483 = vld [vmem:[%s4 + $0x28] sm:$0xff]
        %v484 = vld [vmem:[%s4 + $0x30] sm:$0xff]
        %v485 = vld [vmem:[%s4 + $0x38] sm:$0xff]
        %487 = vset.pattern.permute.xlu0 0
        %488 = vperm.xlu0 %487, %v482
        %v489 = vpop.permute.xlu0 %488
        %492 = vset.pattern.permute.xlu0 0
        %493 = vperm.xlu0 %492, %v483
        %v494 = vpop.permute.xlu0 %493
        %497 = vset.pattern.permute.xlu0 0
        %498 = vperm.xlu0 %497, %v484
        %v499 = vpop.permute.xlu0 %498
        %502 = vset.pattern.permute.xlu0 0
        %503 = vperm.xlu0 %502, %v485
        %v504 = vpop.permute.xlu0 %503
        %vm506 = vcmask 261120
        %v508 = vsel %vm506, %v478, 0
        %v511 = vsel %vm506, %v479, 0
        %v514 = vsel %vm506, %v480, 0
        %v517 = vsel %vm506, %v481, 0
        %519 = vmatpush.msra.mxu0 0.0
        %520 = vmatpush.msra.mxu0 0.0
        %521 = vmatpush.msra.mxu0 0.0
        %522 = vmatpush.msra.mxu0 0.0
        %523 = vmatpush.msra.mxu0 0.0
        %524 = vmatpush.msra.mxu0 0.0
        %525 = vmatpush.msra.mxu0 0.0
        %526 = vmatpush.msra.mxu0 0.0
        %527 = vmatpush.msra.mxu0 0.0
        %528 = vmatpush.msra.mxu0 0.0
        %529 = vmatpush.msra.mxu0 0.0
        %530 = vmatpush.msra.mxu0 0.0
        %531 = vmatpush.msra.mxu0 %v477
        %532 = vmatpush.msra.mxu0 %v462
        %533 = vmatpush.msra.mxu0 %v447
        %534 = vmatpush.msra.mxu0 %v432
        %535 = vmatmul.f32.gmra.mxu0 %v508
        %v536 = vpop.f32.mrf.mxu0
        %v537 = vadd.f32 %v489, %v536
        %538 = vmatmul.f32.gmra.mxu0 %v511
        %v539 = vpop.f32.mrf.mxu0
        %v540 = vadd.f32 %v494, %v539
        %541 = vmatmul.f32.gmra.mxu0 %v514
        %v542 = vpop.f32.mrf.mxu0
        %v543 = vadd.f32 %v499, %v542
        %544 = vmatmul.f32.gmra.mxu0 %v517
        %v545 = vpop.f32.mrf.mxu0
        %v546 = vadd.f32 %v504, %v545
        %547 = vdwg.mxu0
        %v548 = vxor.u32 %v537, 2147483648
        %v549 = vxor.u32 %v540, 2147483648
        %v550 = vxor.u32 %v543, 2147483648
        %v551 = vxor.u32 %v546, 2147483648
        %v552 = vmul.f32 %v548, 1.442695
        %v553 = vpow.pop %v552
        %v554 = vmul.f32 %v549, 1.442695
        %v555 = vpow.pop %v554
        %v556 = vmul.f32 %v550, 1.442695
        %v557 = vpow.pop %v556
        %v558 = vmul.f32 %v551, 1.442695
        %v559 = vpow.pop %v558
        %v560 = vadd.f32 %v553, 1.0
        %v561 = vadd.f32 %v555, 1.0
        %v562 = vadd.f32 %v557, 1.0
        %v563 = vadd.f32 %v559, 1.0
        %v564 = vrcp.pop %v560
        %v565 = vmul.f32 %v560, %v564
        %v566 = vsub.f32 1.0, %v565
        %v567 = vmul.f32 %v564, %v566
        %v568 = vadd.f32 %v564, %v567
        %vm569 = vweird.f32 %v560
        %vm570 = vweird.f32 %v564
        %vm571 = vmor %vm569, %vm570
        %v572 = vsel %vm571, %v564, %v568
        %v573 = vand.u32 2147483647, %v560
        %vm574 = vcmp.eq.f32.partialorder %v573, 8.507059e+37
        %v575 = vand.u32 %v560, 2147483648
        %v576 = vor.u32 1.1754944e-38, %v575
        %v577 = vsel %vm574, %v576, %v572
        %v578 = vmul.f32 1.0, %v577
        %v579 = vrcp.pop %v561
        %v580 = vmul.f32 %v561, %v579
        %v581 = vsub.f32 1.0, %v580
        %v582 = vmul.f32 %v579, %v581
        %v583 = vadd.f32 %v579, %v582
        %vm584 = vweird.f32 %v561
        %vm585 = vweird.f32 %v579
        %vm586 = vmor %vm584, %vm585
        %v587 = vsel %vm586, %v579, %v583
        %v588 = vand.u32 2147483647, %v561
        %vm589 = vcmp.eq.f32.partialorder %v588, 8.507059e+37
        %v590 = vand.u32 %v561, 2147483648
        %v591 = vor.u32 1.1754944e-38, %v590
        %v592 = vsel %vm589, %v591, %v587
        %v593 = vmul.f32 1.0, %v592
        %v594 = vrcp.pop %v562
        %v595 = vmul.f32 %v562, %v594
        %v596 = vsub.f32 1.0, %v595
        %v597 = vmul.f32 %v594, %v596
        %v598 = vadd.f32 %v594, %v597
        %vm599 = vweird.f32 %v562
        %vm600 = vweird.f32 %v594
        %vm601 = vmor %vm599, %vm600
        %v602 = vsel %vm601, %v594, %v598
        %v603 = vand.u32 2147483647, %v562
        %vm604 = vcmp.eq.f32.partialorder %v603, 8.507059e+37
        %v605 = vand.u32 %v562, 2147483648
        %v606 = vor.u32 1.1754944e-38, %v605
        %v607 = vsel %vm604, %v606, %v602
        %v608 = vmul.f32 1.0, %v607
        %v609 = vrcp.pop %v563
        %v610 = vmul.f32 %v563, %v609
        %v611 = vsub.f32 1.0, %v610
        %v612 = vmul.f32 %v609, %v611
        %v613 = vadd.f32 %v609, %v612
        %vm614 = vweird.f32 %v563
        %vm615 = vweird.f32 %v609
        %vm616 = vmor %vm614, %vm615
        %v617 = vsel %vm616, %v609, %v613
        %v618 = vand.u32 2147483647, %v563
        %vm619 = vcmp.eq.f32.partialorder %v618, 8.507059e+37
        %v620 = vand.u32 %v563, 2147483648
        %v621 = vor.u32 1.1754944e-38, %v620
        %v622 = vsel %vm619, %v621, %v617
        %v623 = vmul.f32 1.0, %v622
        %v624 = vld [vmem:[%s3] sm:$0xff]
        %v625 = vld [vmem:[%s3 + $0x8] sm:$0xff]
        %v626 = vld [vmem:[%s4 + $0x40] sm:$0xff]
        %v627 = vld [vmem:[%s4 + $0x48] sm:$0xff]
        %629 = vset.pattern.permute.xlu0 0
        %630 = vperm.xlu0 %629, %v626
        %v631 = vpop.permute.xlu0 %630
        %634 = vset.pattern.permute.xlu0 0
        %635 = vperm.xlu0 %634, %v627
        %v636 = vpop.permute.xlu0 %635
        %v639 = vsel %vm506, %v624, 0
        %v642 = vsel %vm506, %v625, 0
        %644 = vmatpush.msra.mxu0 0.0
        %645 = vmatpush.msra.mxu0 0.0
        %646 = vmatpush.msra.mxu0 0.0
        %647 = vmatpush.msra.mxu0 0.0
        %648 = vmatpush.msra.mxu0 0.0
        %649 = vmatpush.msra.mxu0 0.0
        %650 = vmatpush.msra.mxu0 0.0
        %651 = vmatpush.msra.mxu0 0.0
        %652 = vmatpush.msra.mxu0 0.0
        %653 = vmatpush.msra.mxu0 0.0
        %654 = vmatpush.msra.mxu0 0.0
        %655 = vmatpush.msra.mxu0 0.0
        %656 = vmatpush.msra.mxu0 %v623
        %657 = vmatpush.msra.mxu0 %v608
        %658 = vmatpush.msra.mxu0 %v593
        %659 = vmatpush.msra.mxu0 %v578
        %660 = vmatmul.f32.gmra.mxu0 %v639
        %v661 = vpop.f32.mrf.mxu0
        %v662 = vadd.f32 %v631, %v661
        %663 = vmatmul.f32.gmra.mxu0 %v642
        %v664 = vpop.f32.mrf.mxu0
        %v665 = vadd.f32 %v636, %v664
        %666 = vdwg.mxu0
        %v667 = vld [vmem:[%s296] sm:$0xff]
        %v668 = vld [vmem:[%s296 + $0x8] sm:$0xff]
        %v669 = vadd.f32 %v667, 1e-20
        %v670 = vadd.f32 %v668, 1e-20
        %v671 = vlog2.pop %v669
        %v672 = vmul.f32 %v671, 0.6931472
        %v673 = vlog2.pop %v670
        %v674 = vmul.f32 %v673, 0.6931472
        %v675 = vsub.f32 0.0, %v672
        %v676 = vsub.f32 0.0, %v674
        %v677 = vadd.f32 %v675, 1e-20
        %v678 = vadd.f32 %v676, 1e-20
        %v679 = vlog2.pop %v677
        %v680 = vmul.f32 %v679, 0.6931472
        %v681 = vlog2.pop %v678
        %v682 = vmul.f32 %v681, 0.6931472
        %v683 = vsub.f32 0.0, %v680
        %v684 = vsub.f32 0.0, %v682
        %v685 = vadd.f32 %v683, %v662
        %v686 = vadd.f32 %v684, %v665
        %v687 = vmul.f32 %v685, 10.0
        %v688 = vmul.f32 %v686, 10.0
        %v689 = vmax.f32 %v687, %v688
        %v690 = vrot.slane %v689, 4
        %v691 = vmax.f32 %v689, %v690
        %v692 = vrot.slane %v691, 2
        %v693 = vmax.f32 %v691, %v692
        %v694 = vrot.slane %v693, 1
        %v695 = vmax.f32 %v693, %v694
        %v696 = vsub.f32 %v687, %v695
        %v697 = vsub.f32 %v688, %v695
        %v698 = vmul.f32 %v696, 1.442695
        %v699 = vpow.pop %v698
        %v700 = vmul.f32 %v697, 1.442695
        %v701 = vpow.pop %v700
        %v702 = vadd.f32 %v699, %v701
        %v703 = vrot.slane %v702, 4
        %v704 = vadd.f32 %v702, %v703
        %v705 = vrot.slane %v704, 2
        %v706 = vadd.f32 %v704, %v705
        %v707 = vrot.slane %v706, 1
        %v708 = vadd.f32 %v706, %v707
        %v709 = vrcp.pop %v708
        %v710 = vmul.f32 %v708, %v709
        %v711 = vsub.f32 1.0, %v710
        %v712 = vmul.f32 %v709, %v711
        %v713 = vadd.f32 %v709, %v712
        %vm714 = vweird.f32 %v708
        %vm715 = vweird.f32 %v709
        %vm716 = vmor %vm714, %vm715
        %v717 = vsel %vm716, %v709, %v713
        %v718 = vand.u32 2147483647, %v708
        %vm719 = vcmp.eq.f32.partialorder %v718, 8.507059e+37
        %v720 = vand.u32 %v708, 2147483648
        %v721 = vor.u32 1.1754944e-38, %v720
        %v722 = vsel %vm719, %v721, %v717
        %v723 = vmul.f32 %v699, %v722
        %v724 = vmul.f32 %v701, %v722
        %s725 = scalar_lea.vmem %s296, 16 [#allocation3]
        %v726 = vld [vmem:[%s725] sm:$0xff]
        %v727 = vld [vmem:[%s725 + $0x8] sm:$0xff]
        %v728 = vadd.f32 %v726, 1e-20
        %v729 = vadd.f32 %v727, 1e-20
        %v730 = vlog2.pop %v728
        %v731 = vmul.f32 %v730, 0.6931472
        %v732 = vlog2.pop %v729
        %v733 = vmul.f32 %v732, 0.6931472
        %v734 = vsub.f32 0.0, %v731
        %v735 = vsub.f32 0.0, %v733
        %v736 = vadd.f32 %v734, 1e-20
        %v737 = vadd.f32 %v735, 1e-20
        %v738 = vlog2.pop %v736
        %v739 = vmul.f32 %v738, 0.6931472
        %v740 = vlog2.pop %v737
        %v741 = vmul.f32 %v740, 0.6931472
        %v742 = vsub.f32 0.0, %v739
        %v743 = vsub.f32 0.0, %v741
        %v744 = vadd.f32 %v742, %v662
        %v745 = vadd.f32 %v743, %v665
        %v746 = vmul.f32 %v744, 10.0
        %v747 = vmul.f32 %v745, 10.0
        %v748 = vmax.f32 %v746, %v747
        %v749 = vrot.slane %v748, 4
        %v750 = vmax.f32 %v748, %v749
        %v751 = vrot.slane %v750, 2
        %v752 = vmax.f32 %v750, %v751
        %v753 = vrot.slane %v752, 1
        %v754 = vmax.f32 %v752, %v753
        %v755 = vsub.f32 %v746, %v754
        %v756 = vsub.f32 %v747, %v754
        %v757 = vmul.f32 %v755, 1.442695
        %v758 = vpow.pop %v757
        %v759 = vmul.f32 %v756, 1.442695
        %v760 = vpow.pop %v759
        %v761 = vadd.f32 %v758, %v760
        %v762 = vrot.slane %v761, 4
        %v763 = vadd.f32 %v761, %v762
        %v764 = vrot.slane %v763, 2
        %v765 = vadd.f32 %v763, %v764
        %v766 = vrot.slane %v765, 1
        %v767 = vadd.f32 %v765, %v766
        %v768 = vrcp.pop %v767
        %v769 = vmul.f32 %v767, %v768
        %v770 = vsub.f32 1.0, %v769
        %v771 = vmul.f32 %v768, %v770
        %v772 = vadd.f32 %v768, %v771
        %vm773 = vweird.f32 %v767
        %vm774 = vweird.f32 %v768
        %vm775 = vmor %vm773, %vm774
        %v776 = vsel %vm775, %v768, %v772
        %v777 = vand.u32 2147483647, %v767
        %vm778 = vcmp.eq.f32.partialorder %v777, 8.507059e+37
        %v779 = vand.u32 %v767, 2147483648
        %v780 = vor.u32 1.1754944e-38, %v779
        %v781 = vsel %vm778, %v780, %v776
        %v782 = vmul.f32 %v758, %v781
        %v783 = vmul.f32 %v760, %v781
        %v784 = vmax.f32 %v723, %v782
        %v785 = vmax.f32 %v724, %v783
        %s786 = scalar_lea.vmem %s296, 32 [#allocation3]
        %v787 = vld [vmem:[%s786] sm:$0xff]
        %v788 = vld [vmem:[%s786 + $0x8] sm:$0xff]
        %v789 = vadd.f32 %v787, 1e-20
        %v790 = vadd.f32 %v788, 1e-20
        %v791 = vlog2.pop %v789
        %v792 = vmul.f32 %v791, 0.6931472
        %v793 = vlog2.pop %v790
        %v794 = vmul.f32 %v793, 0.6931472
        %v795 = vsub.f32 0.0, %v792
        %v796 = vsub.f32 0.0, %v794
        %v797 = vadd.f32 %v795, 1e-20
        %v798 = vadd.f32 %v796, 1e-20
        %v799 = vlog2.pop %v797
        %v800 = vmul.f32 %v799, 0.6931472
        %v801 = vlog2.pop %v798
        %v802 = vmul.f32 %v801, 0.6931472
        %v803 = vsub.f32 0.0, %v800
        %v804 = vsub.f32 0.0, %v802
        %v805 = vadd.f32 %v803, %v662
        %v806 = vadd.f32 %v804, %v665
        %v807 = vmul.f32 %v805, 10.0
        %v808 = vmul.f32 %v806, 10.0
        %v809 = vmax.f32 %v807, %v808
        %v810 = vrot.slane %v809, 4
        %v811 = vmax.f32 %v809, %v810
        %v812 = vrot.slane %v811, 2
        %v813 = vmax.f32 %v811, %v812
        %v814 = vrot.slane %v813, 1
        %v815 = vmax.f32 %v813, %v814
        %v816 = vsub.f32 %v807, %v815
        %v817 = vsub.f32 %v808, %v815
        %v818 = vmul.f32 %v816, 1.442695
        %v819 = vpow.pop %v818
        %v820 = vmul.f32 %v817, 1.442695
        %v821 = vpow.pop %v820
        %v822 = vadd.f32 %v819, %v821
        %v823 = vrot.slane %v822, 4
        %v824 = vadd.f32 %v822, %v823
        %v825 = vrot.slane %v824, 2
        %v826 = vadd.f32 %v824, %v825
        %v827 = vrot.slane %v826, 1
        %v828 = vadd.f32 %v826, %v827
        %v829 = vrcp.pop %v828
        %v830 = vmul.f32 %v828, %v829
        %v831 = vsub.f32 1.0, %v830
        %v832 = vmul.f32 %v829, %v831
        %v833 = vadd.f32 %v829, %v832
        %vm834 = vweird.f32 %v828
        %vm835 = vweird.f32 %v829
        %vm836 = vmor %vm834, %vm835
        %v837 = vsel %vm836, %v829, %v833
        %v838 = vand.u32 2147483647, %v828
        %vm839 = vcmp.eq.f32.partialorder %v838, 8.507059e+37
        %v840 = vand.u32 %v828, 2147483648
        %v841 = vor.u32 1.1754944e-38, %v840
        %v842 = vsel %vm839, %v841, %v837
        %v843 = vmul.f32 %v819, %v842
        %v844 = vmul.f32 %v821, %v842
        %v845 = vmax.f32 %v784, %v843
        %v846 = vmax.f32 %v785, %v844
        %s847 = scalar_lea.vmem %s296, 48 [#allocation3]
        %v848 = vld [vmem:[%s847] sm:$0xff]
        %v849 = vld [vmem:[%s847 + $0x8] sm:$0xff]
        %v850 = vadd.f32 %v848, 1e-20
        %v851 = vadd.f32 %v849, 1e-20
        %v852 = vlog2.pop %v850
        %v853 = vmul.f32 %v852, 0.6931472
        %v854 = vlog2.pop %v851
        %v855 = vmul.f32 %v854, 0.6931472
        %v856 = vsub.f32 0.0, %v853
        %v857 = vsub.f32 0.0, %v855
        %v858 = vadd.f32 %v856, 1e-20
        %v859 = vadd.f32 %v857, 1e-20
        %v860 = vlog2.pop %v858
        %v861 = vmul.f32 %v860, 0.6931472
        %v862 = vlog2.pop %v859
        %v863 = vmul.f32 %v862, 0.6931472
        %v864 = vsub.f32 0.0, %v861
        %v865 = vsub.f32 0.0, %v863
        %v866 = vadd.f32 %v864, %v662
        %v867 = vadd.f32 %v865, %v665
        %v868 = vmul.f32 %v866, 10.0
        %v869 = vmul.f32 %v867, 10.0
        %v870 = vmax.f32 %v868, %v869
        %v871 = vrot.slane %v870, 4
        %v872 = vmax.f32 %v870, %v871
        %v873 = vrot.slane %v872, 2
        %v874 = vmax.f32 %v872, %v873
        %v875 = vrot.slane %v874, 1
        %v876 = vmax.f32 %v874, %v875
        %v877 = vsub.f32 %v868, %v876
        %v878 = vsub.f32 %v869, %v876
        %v879 = vmul.f32 %v877, 1.442695
        %v880 = vpow.pop %v879
        %v881 = vmul.f32 %v878, 1.442695
        %v882 = vpow.pop %v881
        %v883 = vadd.f32 %v880, %v882
        %v884 = vrot.slane %v883, 4
        %v885 = vadd.f32 %v883, %v884
        %v886 = vrot.slane %v885, 2
        %v887 = vadd.f32 %v885, %v886
        %v888 = vrot.slane %v887, 1
        %v889 = vadd.f32 %v887, %v888
        %v890 = vrcp.pop %v889
        %v891 = vmul.f32 %v889, %v890
        %v892 = vsub.f32 1.0, %v891
        %v893 = vmul.f32 %v890, %v892
        %v894 = vadd.f32 %v890, %v893
        %vm895 = vweird.f32 %v889
        %vm896 = vweird.f32 %v890
        %vm897 = vmor %vm895, %vm896
        %v898 = vsel %vm897, %v890, %v894
        %v899 = vand.u32 2147483647, %v889
        %vm900 = vcmp.eq.f32.partialorder %v899, 8.507059e+37
        %v901 = vand.u32 %v889, 2147483648
        %v902 = vor.u32 1.1754944e-38, %v901
        %v903 = vsel %vm900, %v902, %v898
        %v904 = vmul.f32 %v880, %v903
        %v905 = vmul.f32 %v882, %v903
        %v906 = vmax.f32 %v845, %v904
        %v907 = vmax.f32 %v846, %v905
        %s908 = scalar_lea.vmem %s296, 64 [#allocation3]
        %v909 = vld [vmem:[%s908] sm:$0xff]
        %v910 = vld [vmem:[%s908 + $0x8] sm:$0xff]
        %v911 = vadd.f32 %v909, 1e-20
        %v912 = vadd.f32 %v910, 1e-20
        %v913 = vlog2.pop %v911
        %v914 = vmul.f32 %v913, 0.6931472
        %v915 = vlog2.pop %v912
        %v916 = vmul.f32 %v915, 0.6931472
        %v917 = vsub.f32 0.0, %v914
        %v918 = vsub.f32 0.0, %v916
        %v919 = vadd.f32 %v917, 1e-20
        %v920 = vadd.f32 %v918, 1e-20
        %v921 = vlog2.pop %v919
        %v922 = vmul.f32 %v921, 0.6931472
        %v923 = vlog2.pop %v920
        %v924 = vmul.f32 %v923, 0.6931472
        %v925 = vsub.f32 0.0, %v922
        %v926 = vsub.f32 0.0, %v924
        %v927 = vadd.f32 %v925, %v662
        %v928 = vadd.f32 %v926, %v665
        %v929 = vmul.f32 %v927, 10.0
        %v930 = vmul.f32 %v928, 10.0
        %v931 = vmax.f32 %v929, %v930
        %v932 = vrot.slane %v931, 4
        %v933 = vmax.f32 %v931, %v932
        %v934 = vrot.slane %v933, 2
        %v935 = vmax.f32 %v933, %v934
        %v936 = vrot.slane %v935, 1
        %v937 = vmax.f32 %v935, %v936
        %v938 = vsub.f32 %v929, %v937
        %v939 = vsub.f32 %v930, %v937
        %v940 = vmul.f32 %v938, 1.442695
        %v941 = vpow.pop %v940
        %v942 = vmul.f32 %v939, 1.442695
        %v943 = vpow.pop %v942
        %v944 = vadd.f32 %v941, %v943
        %v945 = vrot.slane %v944, 4
        %v946 = vadd.f32 %v944, %v945
        %v947 = vrot.slane %v946, 2
        %v948 = vadd.f32 %v946, %v947
        %v949 = vrot.slane %v948, 1
        %v950 = vadd.f32 %v948, %v949
        %v951 = vrcp.pop %v950
        %v952 = vmul.f32 %v950, %v951
        %v953 = vsub.f32 1.0, %v952
        %v954 = vmul.f32 %v951, %v953
        %v955 = vadd.f32 %v951, %v954
        %vm956 = vweird.f32 %v950
        %vm957 = vweird.f32 %v951
        %vm958 = vmor %vm956, %vm957
        %v959 = vsel %vm958, %v951, %v955
        %v960 = vand.u32 2147483647, %v950
        %vm961 = vcmp.eq.f32.partialorder %v960, 8.507059e+37
        %v962 = vand.u32 %v950, 2147483648
        %v963 = vor.u32 1.1754944e-38, %v962
        %v964 = vsel %vm961, %v963, %v959
        %v965 = vmul.f32 %v941, %v964
        %v966 = vmul.f32 %v943, %v964
        %v967 = vmax.f32 %v906, %v965
        %v968 = vmax.f32 %v907, %v966
        %969 = vst [vmem:[%s329] sm:$0xff] %v967
        %970 = vst [vmem:[%s329 + $0x8] sm:$0xff] %v968
        %s971 = sand.u32 %s167, 1
        %s972 = scalar_lea.sflag [#allocation5], %s971
        %s973 = sand.u32 %s167, 1
        %s974 = smul.addr %s973, 16
        %s975 = scalar_lea.vmem [#allocation6], %s974
        // Predicated region
        $region87: #{tpu_custom_call.1} parent=77 // pred_check
          %p976 = pneg %p177
        $region88: #{tpu_custom_call.1} parent=77 // pred_check_branch
          %978 = sbr.rel (%p976) target = $region90
        $region89: #{tpu_custom_call.1} parent=77 // pred_region
          %980 = vsyncadd %s972, 0
          %s981 = smul.addr %s23, 8
          %s982 = scalar_lea.hbm %s6, %s981
          %s983 = sshll.u32 %s975, 4
          %s984 = int_to_ptr.vmem [resolvable:$true] %s983
          %s985 = sshll.u32 %s982, 4
          %s986 = int_to_ptr.hbm [resolvable:$true] %s985
          %991 = dma.vmem_to_hbm [thread:$0]  %s984, 256, %s986, %s972, 128, 256, 8
        $region90: #{tpu_custom_call.1} parent=77 // pred_fallthru
          _
      $region78: #{tpu_custom_call.1} parent=5 // pred_fallthru
        _
      %p992 = scmp.le.s32.totalorder 2, %s18
      // Predicated region
      $region91: #{tpu_custom_call.1} parent=5 // pred_check
        %p993 = pneg %p992
      $region92: #{tpu_custom_call.1} parent=5 // pred_check_branch
        %995 = sbr.rel (%p993) target = $region94
      $region93: #{tpu_custom_call.1} parent=5 // pred_region
        %s996 = ssub.s32 %s18, 2
        // Predicated region
        $region95: #{tpu_custom_call.1} parent=93 // pred_check
          %p997 = pneg %p183
        $region96: #{tpu_custom_call.1} parent=93 // pred_check_branch
          %999 = sbr.rel (%p997) target = $region98
        $region97: #{tpu_custom_call.1} parent=93 // pred_region
          %s1000 = sand.u32 %s168, 1
          %s1001 = scalar_lea.sflag [#allocation5], %s1000
          %s1002 = sand.u32 %s168, 1
          %s1003 = smul.addr %s1002, 16
          %s1004 = scalar_lea.vmem [#allocation6], %s1003
          %1006 = dma.done %s1001, 256
        $region98: #{tpu_custom_call.1} parent=93 // pred_fallthru
          _
      $region94: #{tpu_custom_call.1} parent=5 // pred_fallthru
        _
    $region6: #{tpu_custom_call.1} parent=1 // loop_footer
      %s22 = sadd.s32 1, %s18
    $region7: #{tpu_custom_call.1} parent=1 // loop_footer_branch
      %17 = sbr.rel target = $region3
    $region8: #{tpu_custom_call.1} parent=1 // loop_exit
      _
    %1007 = vsyncpa [#allocation4], 1
    %s1008 = scalar_lea.sflag [#allocation4], 1
    %1009 = vsyncpa %s1008, 1
    %1010 = vsyncpa [#allocation5], 1
    %s1011 = scalar_lea.sflag [#allocation5], 1
    %1012 = vsyncpa %s1011, 1

</llo_original>
